<compile_context>
chip_gen: v7x
topology: tpu7x:2x2x1
jax: 0.10.0
libtpu: 0.0.40
codegen_flags: <defaults>
</compile_context>

<pallas_src>
import functools
import math

import jax
import jax.numpy as jnp
from jax import lax
from jax.experimental import pallas as pl
from jax.experimental.pallas import tpu as pltpu


_VMEM_LIMIT = 64 * 1024 * 1024   # safe on v5e/v6e (128 MiB phys) and v7x (64 MiB phys)


# ---------------------------------------------------------------------------
# Tile helpers
# ---------------------------------------------------------------------------

def _pick_tile(dim, cap, align):
    """Largest tile <= cap that divides `dim` and is `align`-aligned; else full dim."""
    if dim <= cap:
        return dim
    t = (cap // align) * align
    while t >= align:
        if dim % t == 0:
            return t
        t -= align
    return dim  # fall back to the full (untiled) dimension


def _pick_hblk(num_heads, dk):
    """Heads per attention grid step.

    Block last-dim width = hblk*dk must equal D or be a multiple of 128 (Mosaic
    tiling rule); prefer lane-dense blocks up to 512 lanes.
    """
    d_model = num_heads * dk
    if d_model <= 512:
        return num_heads
    for hb in range(num_heads, 0, -1):
        if num_heads % hb == 0 and (hb * dk) % 128 == 0 and hb * dk <= 512:
            return hb
    return num_heads


# ---------------------------------------------------------------------------
# Kernels
# ---------------------------------------------------------------------------

def _qkv_proj_kernel(xq_ref, xk_ref, xv_ref,
                     wq_ref, wk_ref, wv_ref,
                     bq_ref, bk_ref, bv_ref,
                     oq_ref, ok_ref, ov_ref,
                     accq_ref, acck_ref, accv_ref):
    """Fused Q/K/V projections: three matmuls per grid step, one pipeline."""
    kk = pl.program_id(2)

    @pl.when(kk == 0)
    def _():
        accq_ref[...] = jnp.zeros_like(accq_ref)
        acck_ref[...] = jnp.zeros_like(acck_ref)
        accv_ref[...] = jnp.zeros_like(accv_ref)

    accq_ref[...] += jnp.dot(xq_ref[...], wq_ref[...],
                             preferred_element_type=jnp.float32)
    acck_ref[...] += jnp.dot(xk_ref[...], wk_ref[...],
                             preferred_element_type=jnp.float32)
    accv_ref[...] += jnp.dot(xv_ref[...], wv_ref[...],
                             preferred_element_type=jnp.float32)

    @pl.when(kk == pl.num_programs(2) - 1)
    def _():
        oq_ref[...] = (accq_ref[...] + bq_ref[...].astype(jnp.float32)).astype(oq_ref.dtype)
        ok_ref[...] = (acck_ref[...] + bk_ref[...].astype(jnp.float32)).astype(ok_ref.dtype)
        ov_ref[...] = (accv_ref[...] + bv_ref[...].astype(jnp.float32)).astype(ov_ref.dtype)


def _attn_out_kernel(q_ref, k_ref, v_ref, wo_ref, bo_ref, o_ref, acc_ref,
                     *, hblk, dk):
    """Attention for `hblk` heads of one (batch, q-block), fused with the output
    projection.

    Refs q/k/v are (1, tq|S, hblk*dk) lane-slices of the (B, S, D) projections:
    head selection is pure DMA addressing (no transposes).  The per-block
    attention output (tq, hblk*dk) is multiplied by the matching W_o row-slice
    and accumulated in f32 over the head-block ("arbitrary", last) grid axis.
    """
    hh = pl.program_id(2)

    @pl.when(hh == 0)
    def _():
        acc_ref[...] = jnp.zeros_like(acc_ref)

    qb = q_ref[0]                      # (tq, hblk*dk)
    kb = k_ref[0]                      # (S,  hblk*dk)
    vb = v_ref[0]
    scale = 1.0 / math.sqrt(dk)

    outs = []
    for h in range(hblk):              # static unrolled loop over heads in the block
        lo, hi = h * dk, (h + 1) * dk
        q = qb[:, lo:hi] * scale       # fold softmax scale into Q (S*dk mults)
        k = kb[:, lo:hi]
        v = vb[:, lo:hi]
        # contract last dims directly (no k.T materialization through the XLU)
        s = lax.dot_general(q, k, (((1,), (1,)), ((), ())),
                            preferred_element_type=jnp.float32)
        s = s - jnp.max(s, axis=-1, keepdims=True)
        p = jnp.exp(s)
        p = p * pl.reciprocal(jnp.sum(p, axis=-1, keepdims=True), approx=True)
        outs.append(jnp.dot(p.astype(v.dtype), v,
                            preferred_element_type=jnp.float32))   # (tq, dk) f32

    attn_blk = outs[0] if hblk == 1 else jnp.concatenate(outs, axis=-1)   # (tq, width)
    # partial output projection with a wide (>=128 lane) contraction dim
    acc_ref[...] += jnp.dot(attn_blk.astype(wo_ref.dtype), wo_ref[...],
                            preferred_element_type=jnp.float32)

    @pl.when(hh == pl.num_programs(2) - 1)
    def _():
        o_ref[0] = (acc_ref[...] + bo_ref[...].astype(jnp.float32)).astype(o_ref.dtype)


# ---------------------------------------------------------------------------
# Wrappers
# ---------------------------------------------------------------------------

def pallas_qkv_proj(xq, xk, xv, wq, wk, wv, bq, bk, bv):
    """Fused Q/K/V projections: one pallas_call, three (M, D) outputs."""
    M, K = xq.shape
    N = wq.shape[1]
    tm = _pick_tile(M, 256, 8)
    tn = _pick_tile(N, 512, 128)
    tk = _pick_tile(K, 512, 128)
    grid = (M // tm, N // tn, K // tk)
    itemsize = jnp.dtype(xq.dtype).itemsize

    x_spec = pl.BlockSpec((tm, tk), lambda i, j, k: (i, k))
    w_spec = pl.BlockSpec((tk, tn), lambda i, j, k: (k, j))
    b_spec = pl.BlockSpec((1, tn), lambda i, j, k: (0, j))
    o_spec = pl.BlockSpec((tm, tn), lambda i, j, k: (i, j))
    out_sds = jax.ShapeDtypeStruct((M, N), xq.dtype)

    cost = pl.CostEstimate(
        flops=3 * 2 * M * N * K, transcendentals=0,
        bytes_accessed=(3 * M * K + 3 * K * N + 3 * N + 3 * M * N) * itemsize)

    return pl.pallas_call(
        _qkv_proj_kernel,
        out_shape=(out_sds, out_sds, out_sds),
        grid_spec=pltpu.PrefetchScalarGridSpec(
            num_scalar_prefetch=0,
            grid=grid,
            in_specs=[x_spec, x_spec, x_spec,
                      w_spec, w_spec, w_spec,
                      b_spec, b_spec, b_spec],
            out_specs=(o_spec, o_spec, o_spec),
            scratch_shapes=[pltpu.VMEM((tm, tn), jnp.float32) for _ in range(3)]),
        compiler_params=pltpu.CompilerParams(
            dimension_semantics=("parallel", "parallel", "arbitrary"),
            vmem_limit_bytes=_VMEM_LIMIT),
        cost_estimate=cost,
    )(xq, xk, xv, wq, wk, wv,
      bq.reshape(1, N), bk.reshape(1, N), bv.reshape(1, N))


def pallas_attention_output(qp, kp, vp, wo, bo, num_heads):
    """qp/kp/vp: (B, S, D) projected tensors -> (B, S, D) = softmax(QK^T)V @ Wo + bo.

    Grid: (batch, q-block, head-block).  Heads are sliced out of the lane dim via
    the index_map; the head-block axis is the reduction axis of the fused output
    projection (last, "arbitrary"); batch and q-block are "parallel" (megacore).
    """
    B, S, D = qp.shape
    dk = D // num_heads
    hblk = _pick_hblk(num_heads, dk)
    hb_count = num_heads // hblk
    width = hblk * dk
    tq = _pick_tile(S, 512, 8)
    nq = S // tq

    q_spec = pl.BlockSpec((1, tq, width), lambda b, i, h: (b, i, h))
    kv_spec = pl.BlockSpec((1, S, width), lambda b, i, h: (b, 0, h))
    wo_spec = pl.BlockSpec((width, D), lambda b, i, h: (h, 0))
    bo_spec = pl.BlockSpec((1, D), lambda b, i, h: (0, 0))
    o_spec = pl.BlockSpec((1, tq, D), lambda b, i, h: (b, i, 0))

    itemsize = jnp.dtype(qp.dtype).itemsize
    cost = pl.CostEstimate(
        flops=4 * B * num_heads * S * S * dk + 2 * B * S * D * D,
        transcendentals=B * num_heads * S * S,
        bytes_accessed=(4 * B * S * D + D * D + D) * itemsize)

    kernel = functools.partial(_attn_out_kernel, hblk=hblk, dk=dk)
    return pl.pallas_call(
        kernel,
        out_shape=jax.ShapeDtypeStruct((B, S, D), qp.dtype),
        grid_spec=pltpu.PrefetchScalarGridSpec(
            num_scalar_prefetch=0,
            grid=(B, nq, hb_count),
            in_specs=[q_spec, kv_spec, kv_spec, wo_spec, bo_spec],
            out_specs=o_spec,
            scratch_shapes=[pltpu.VMEM((tq, D), jnp.float32)]),
        compiler_params=pltpu.CompilerParams(
            dimension_semantics=("parallel", "parallel", "arbitrary"),
            vmem_limit_bytes=_VMEM_LIMIT),
        cost_estimate=cost,
    )(qp, kp, vp, wo, bo.reshape(1, D))


def multi_head_attention(q, k, v, params, num_heads):
    """Forward pass equivalent to the PyTorch MultiHeadAttention (mask=None)."""
    B, S, D = q.shape
    qp, kp, vp = pallas_qkv_proj(
        q.reshape(B * S, D), k.reshape(B * S, D), v.reshape(B * S, D),
        params["wq"], params["wk"], params["wv"],
        params["bq"], params["bk"], params["bv"])
    qp = qp.reshape(B, S, D)
    kp = kp.reshape(B, S, D)
    vp = vp.reshape(B, S, D)

    # attention + output projection fused: no intermediate (B, S, D) HBM roundtrip
    return pallas_attention_output(qp, kp, vp, params["wo"], params["bo"], num_heads)


# ---------------------------------------------------------------------------
# Deterministic parameter init (PyTorch nn.Linear-style uniform)
# ---------------------------------------------------------------------------

def init_params(key, d_model):
    bound = 1.0 / math.sqrt(d_model)
    keys = jax.random.split(key, 8)

    def u(kk, shape):
        return jax.random.uniform(kk, shape, jnp.float32, -bound, bound)

    return {
        # weights stored as (in_features, out_features) == W^T of torch layout
        "wq": u(keys[0], (d_model, d_model)), "bq": u(keys[1], (d_model,)),
        "wk": u(keys[2], (d_model, d_model)), "bk": u(keys[3], (d_model,)),
        "wv": u(keys[4], (d_model, d_model)), "bv": u(keys[5], (d_model,)),
        "wo": u(keys[6], (d_model, d_model)), "bo": u(keys[7], (d_model,)),
    }


if __name__ == "__main__":
    B, S, d_model, num_heads = 2, 8, 32, 4

    root = jax.random.PRNGKey(0)
    kq, kk, kv, kp = jax.random.split(root, 4)
    q = jax.random.normal(kq, (B, S, d_model), jnp.float32)
    k = jax.random.normal(kk, (B, S, d_model), jnp.float32)
    v = jax.random.normal(kv, (B, S, d_model), jnp.float32)
    params = init_params(kp, d_model)

    out = multi_head_attention(q, k, v, params, num_heads)
    out = jax.block_until_ready(out)
    assert out.shape == (B, S, d_model)

    # pure-JAX reference for sanity
    def ref_forward(q, k, v):
        dk = d_model // num_heads

        def lin(x, w, b):
            return x @ w + b

        qp = lin(q, params["wq"], params["bq"])
        kp_ = lin(k, params["wk"], params["bk"])
        vp = lin(v, params["wv"], params["bv"])

        def split(x):
            return x.reshape(B, S, num_heads, dk).transpose(0, 2, 1, 3)

        qh, kh, vh = split(qp), split(kp_), split(vp)
        s = jnp.einsum("bhqd,bhkd->bhqk", qh, kh) / math.sqrt(dk)
        p = jax.nn.softmax(s, axis=-1)
        a = jnp.einsum("bhqk,bhkd->bhqd", p, vh)
        a = a.transpose(0, 2, 1, 3).reshape(B, S, d_model)
        return lin(a, params["wo"], params["bo"])

    ref = ref_forward(q, k, v)
    # tolerance slightly relaxed because softmax uses the EUP approximate reciprocal
    assert jnp.allclose(out, ref, atol=2e-3, rtol=2e-3)

    print("KERNEL_OK")
</pallas_src>

<mosaic_0001>
module attributes {stable_mosaic.version = 11 : i64} {
  func.func @_qkv_proj_kernel(%arg0: i32, %arg1: i32, %arg2: i32, %arg3: memref<16x32xf32, #tpu.memory_space<vmem>>, %arg4: memref<16x32xf32, #tpu.memory_space<vmem>>, %arg5: memref<16x32xf32, #tpu.memory_space<vmem>>, %arg6: memref<32x32xf32, #tpu.memory_space<vmem>>, %arg7: memref<32x32xf32, #tpu.memory_space<vmem>>, %arg8: memref<32x32xf32, #tpu.memory_space<vmem>>, %arg9: memref<1x32xf32, #tpu.memory_space<vmem>>, %arg10: memref<1x32xf32, #tpu.memory_space<vmem>>, %arg11: memref<1x32xf32, #tpu.memory_space<vmem>>, %arg12: memref<16x32xf32, #tpu.memory_space<vmem>>, %arg13: memref<16x32xf32, #tpu.memory_space<vmem>>, %arg14: memref<16x32xf32, #tpu.memory_space<vmem>>, %arg15: memref<16x32xf32, #tpu.memory_space<vmem>>, %arg16: memref<16x32xf32, #tpu.memory_space<vmem>>, %arg17: memref<16x32xf32, #tpu.memory_space<vmem>>) attributes {dimension_semantics = [#tpu.dimension_semantics<parallel>, #tpu.dimension_semantics<parallel>, #tpu.dimension_semantics<arbitrary>], iteration_bounds = array<i64: 1, 1, 1>, scalar_prefetch = 0 : i64, scratch_operands = 3 : i64, tpu.core_type = #tpu.core_type<tc>, window_params = [{transform_indices = @transform_0, window_bounds = array<i64: 16, 32>}, {transform_indices = @transform_1, window_bounds = array<i64: 16, 32>}, {transform_indices = @transform_2, window_bounds = array<i64: 16, 32>}, {transform_indices = @transform_3, window_bounds = array<i64: 32, 32>}, {transform_indices = @transform_4, window_bounds = array<i64: 32, 32>}, {transform_indices = @transform_5, window_bounds = array<i64: 32, 32>}, {transform_indices = @transform_6, window_bounds = array<i64: 1, 32>}, {transform_indices = @transform_7, window_bounds = array<i64: 1, 32>}, {transform_indices = @transform_8, window_bounds = array<i64: 1, 32>}, {transform_indices = @transform_9, window_bounds = array<i64: 16, 32>}, {transform_indices = @transform_10, window_bounds = array<i64: 16, 32>}, {transform_indices = @transform_11, window_bounds = array<i64: 16, 32>}]} {
    %c0_i32 = arith.constant 0 : i32
    %0 = arith.cmpi eq, %arg2, %c0_i32 : i32
    %1 = arith.extui %0 : i1 to i32
    %c0_i32_0 = arith.constant 0 : i32
    %2 = arith.cmpi ne, %1, %c0_i32_0 : i32
    scf.if %2 {
      %cst_28 = arith.constant 0.000000e+00 : f32
      %24 = vector.broadcast %cst_28 : f32 to vector<16x32xf32>
      %c0_29 = arith.constant 0 : index
      %c0_30 = arith.constant 0 : index
      %25 = vector.load %arg15[%c0_29, %c0_30] : memref<16x32xf32, #tpu.memory_space<vmem>>, vector<16x32xf32>
      tpu.vector_store %arg15[%c0_29, %c0_30], %24 {strides = array<i32>} : memref<16x32xf32, #tpu.memory_space<vmem>>, vector<16x32xf32>,
      %cst_31 = arith.constant 0.000000e+00 : f32
      %26 = vector.broadcast %cst_31 : f32 to vector<16x32xf32>
      %c0_32 = arith.constant 0 : index
      %c0_33 = arith.constant 0 : index
      %27 = vector.load %arg16[%c0_32, %c0_33] : memref<16x32xf32, #tpu.memory_space<vmem>>, vector<16x32xf32>
      tpu.vector_store %arg16[%c0_32, %c0_33], %26 {strides = array<i32>} : memref<16x32xf32, #tpu.memory_space<vmem>>, vector<16x32xf32>,
      %cst_34 = arith.constant 0.000000e+00 : f32
      %28 = vector.broadcast %cst_34 : f32 to vector<16x32xf32>
      %c0_35 = arith.constant 0 : index
      %c0_36 = arith.constant 0 : index
      %29 = vector.load %arg17[%c0_35, %c0_36] : memref<16x32xf32, #tpu.memory_space<vmem>>, vector<16x32xf32>
      tpu.vector_store %arg17[%c0_35, %c0_36], %28 {strides = array<i32>} : memref<16x32xf32, #tpu.memory_space<vmem>>, vector<16x32xf32>,
    } else {
    }
    %c0 = arith.constant 0 : index
    %c0_1 = arith.constant 0 : index
    %3 = vector.load %arg15[%c0, %c0_1] : memref<16x32xf32, #tpu.memory_space<vmem>>, vector<16x32xf32>
    %c0_2 = arith.constant 0 : index
    %c0_3 = arith.constant 0 : index
    %4 = vector.load %arg3[%c0_2, %c0_3] : memref<16x32xf32, #tpu.memory_space<vmem>>, vector<16x32xf32>
    %c0_4 = arith.constant 0 : index
    %c0_5 = arith.constant 0 : index
    %5 = vector.load %arg6[%c0_4, %c0_5] : memref<32x32xf32, #tpu.memory_space<vmem>>, vector<32x32xf32>
    %cst = arith.constant dense<0.000000e+00> : vector<16x32xf32>
    %6 = tpu.matmul %4, %5, %cst {dimension_numbers = #tpu.dot_dimension_numbers<[1], [0], [0], [1], [0, 0, 1, 1], [], []>} : vector<16x32xf32>, vector<32x32xf32>, vector<16x32xf32> -> vector<16x32xf32>
    %7 = arith.addf %3, %6 : vector<16x32xf32>
    %c0_6 = arith.constant 0 : index
    %c0_7 = arith.constant 0 : index
    %8 = vector.load %arg15[%c0_6, %c0_7] : memref<16x32xf32, #tpu.memory_space<vmem>>, vector<16x32xf32>
    tpu.vector_store %arg15[%c0_6, %c0_7], %7 {strides = array<i32>} : memref<16x32xf32, #tpu.memory_space<vmem>>, vector<16x32xf32>,
    %c0_8 = arith.constant 0 : index
    %c0_9 = arith.constant 0 : index
    %9 = vector.load %arg16[%c0_8, %c0_9] : memref<16x32xf32, #tpu.memory_space<vmem>>, vector<16x32xf32>
    %c0_10 = arith.constant 0 : index
    %c0_11 = arith.constant 0 : index
    %10 = vector.load %arg4[%c0_10, %c0_11] : memref<16x32xf32, #tpu.memory_space<vmem>>, vector<16x32xf32>
    %c0_12 = arith.constant 0 : index
    %c0_13 = arith.constant 0 : index
    %11 = vector.load %arg7[%c0_12, %c0_13] : memref<32x32xf32, #tpu.memory_space<vmem>>, vector<32x32xf32>
    %cst_14 = arith.constant dense<0.000000e+00> : vector<16x32xf32>
    %12 = tpu.matmul %10, %11, %cst_14 {dimension_numbers = #tpu.dot_dimension_numbers<[1], [0], [0], [1], [0, 0, 1, 1], [], []>} : vector<16x32xf32>, vector<32x32xf32>, vector<16x32xf32> -> vector<16x32xf32>
    %13 = arith.addf %9, %12 : vector<16x32xf32>
    %c0_15 = arith.constant 0 : index
    %c0_16 = arith.constant 0 : index
    %14 = vector.load %arg16[%c0_15, %c0_16] : memref<16x32xf32, #tpu.memory_space<vmem>>, vector<16x32xf32>
    tpu.vector_store %arg16[%c0_15, %c0_16], %13 {strides = array<i32>} : memref<16x32xf32, #tpu.memory_space<vmem>>, vector<16x32xf32>,
    %c0_17 = arith.constant 0 : index
    %c0_18 = arith.constant 0 : index
    %15 = vector.load %arg17[%c0_17, %c0_18] : memref<16x32xf32, #tpu.memory_space<vmem>>, vector<16x32xf32>
    %c0_19 = arith.constant 0 : index
    %c0_20 = arith.constant 0 : index
    %16 = vector.load %arg5[%c0_19, %c0_20] : memref<16x32xf32, #tpu.memory_space<vmem>>, vector<16x32xf32>
    %c0_21 = arith.constant 0 : index
    %c0_22 = arith.constant 0 : index
    %17 = vector.load %arg8[%c0_21, %c0_22] : memref<32x32xf32, #tpu.memory_space<vmem>>, vector<32x32xf32>
    %cst_23 = arith.constant dense<0.000000e+00> : vector<16x32xf32>
    %18 = tpu.matmul %16, %17, %cst_23 {dimension_numbers = #tpu.dot_dimension_numbers<[1], [0], [0], [1], [0, 0, 1, 1], [], []>} : vector<16x32xf32>, vector<32x32xf32>, vector<16x32xf32> -> vector<16x32xf32>
    %19 = arith.addf %15, %18 : vector<16x32xf32>
    %c0_24 = arith.constant 0 : index
    %c0_25 = arith.constant 0 : index
    %20 = vector.load %arg17[%c0_24, %c0_25] : memref<16x32xf32, #tpu.memory_space<vmem>>, vector<16x32xf32>
    tpu.vector_store %arg17[%c0_24, %c0_25], %19 {strides = array<i32>} : memref<16x32xf32, #tpu.memory_space<vmem>>, vector<16x32xf32>,
    %c0_i32_26 = arith.constant 0 : i32
    %21 = arith.cmpi eq, %arg2, %c0_i32_26 : i32
    %22 = arith.extui %21 : i1 to i32
    %c0_i32_27 = arith.constant 0 : i32
    %23 = arith.cmpi ne, %22, %c0_i32_27 : i32
    scf.if %23 {
      %c0_28 = arith.constant 0 : index
      %c0_29 = arith.constant 0 : index
      %24 = vector.load %arg15[%c0_28, %c0_29] : memref<16x32xf32, #tpu.memory_space<vmem>>, vector<16x32xf32>
      %c0_30 = arith.constant 0 : index
      %c0_31 = arith.constant 0 : index
      %25 = vector.load %arg9[%c0_30, %c0_31] : memref<1x32xf32, #tpu.memory_space<vmem>>, vector<1x32xf32>
      %26 = vector.broadcast %25 : vector<1x32xf32> to vector<16x32xf32>
      %27 = arith.addf %24, %26 : vector<16x32xf32>
      %c0_32 = arith.constant 0 : index
      %c0_33 = arith.constant 0 : index
      %28 = vector.load %arg12[%c0_32, %c0_33] : memref<16x32xf32, #tpu.memory_space<vmem>>, vector<16x32xf32>
      tpu.vector_store %arg12[%c0_32, %c0_33], %27 {strides = array<i32>} : memref<16x32xf32, #tpu.memory_space<vmem>>, vector<16x32xf32>,
      %c0_34 = arith.constant 0 : index
      %c0_35 = arith.constant 0 : index
      %29 = vector.load %arg16[%c0_34, %c0_35] : memref<16x32xf32, #tpu.memory_space<vmem>>, vector<16x32xf32>
      %c0_36 = arith.constant 0 : index
      %c0_37 = arith.constant 0 : index
      %30 = vector.load %arg10[%c0_36, %c0_37] : memref<1x32xf32, #tpu.memory_space<vmem>>, vector<1x32xf32>
      %31 = vector.broadcast %30 : vector<1x32xf32> to vector<16x32xf32>
      %32 = arith.addf %29, %31 : vector<16x32xf32>
      %c0_38 = arith.constant 0 : index
      %c0_39 = arith.constant 0 : index
      %33 = vector.load %arg13[%c0_38, %c0_39] : memref<16x32xf32, #tpu.memory_space<vmem>>, vector<16x32xf32>
      tpu.vector_store %arg13[%c0_38, %c0_39], %32 {strides = array<i32>} : memref<16x32xf32, #tpu.memory_space<vmem>>, vector<16x32xf32>,
      %c0_40 = arith.constant 0 : index
      %c0_41 = arith.constant 0 : index
      %34 = vector.load %arg17[%c0_40, %c0_41] : memref<16x32xf32, #tpu.memory_space<vmem>>, vector<16x32xf32>
      %c0_42 = arith.constant 0 : index
      %c0_43 = arith.constant 0 : index
      %35 = vector.load %arg11[%c0_42, %c0_43] : memref<1x32xf32, #tpu.memory_space<vmem>>, vector<1x32xf32>
      %36 = vector.broadcast %35 : vector<1x32xf32> to vector<16x32xf32>
      %37 = arith.addf %34, %36 : vector<16x32xf32>
      %c0_44 = arith.constant 0 : index
      %c0_45 = arith.constant 0 : index
      %38 = vector.load %arg14[%c0_44, %c0_45] : memref<16x32xf32, #tpu.memory_space<vmem>>, vector<16x32xf32>
      tpu.vector_store %arg14[%c0_44, %c0_45], %37 {strides = array<i32>} : memref<16x32xf32, #tpu.memory_space<vmem>>, vector<16x32xf32>,
    } else {
    }
    return
  }
  func.func @transform_0(%arg0: i32, %arg1: i32, %arg2: i32) -> (i32, i32) {
    %c0_i32 = arith.constant 0 : i32
    return %arg0, %arg2 : i32, i32
  }
  func.func @transform_1(%arg0: i32, %arg1: i32, %arg2: i32) -> (i32, i32) {
    %c0_i32 = arith.constant 0 : i32
    return %arg0, %arg2 : i32, i32
  }
  func.func @transform_2(%arg0: i32, %arg1: i32, %arg2: i32) -> (i32, i32) {
    %c0_i32 = arith.constant 0 : i32
    return %arg0, %arg2 : i32, i32
  }
  func.func @transform_3(%arg0: i32, %arg1: i32, %arg2: i32) -> (i32, i32) {
    %c0_i32 = arith.constant 0 : i32
    return %arg2, %arg1 : i32, i32
  }
  func.func @transform_4(%arg0: i32, %arg1: i32, %arg2: i32) -> (i32, i32) {
    %c0_i32 = arith.constant 0 : i32
    return %arg2, %arg1 : i32, i32
  }
  func.func @transform_5(%arg0: i32, %arg1: i32, %arg2: i32) -> (i32, i32) {
    %c0_i32 = arith.constant 0 : i32
    return %arg2, %arg1 : i32, i32
  }
  func.func @transform_6(%arg0: i32, %arg1: i32, %arg2: i32) -> (i32, i32) {
    %c0_i32 = arith.constant 0 : i32
    %c0_i32_0 = arith.constant 0 : i32
    return %c0_i32, %arg1 : i32, i32
  }
  func.func @transform_7(%arg0: i32, %arg1: i32, %arg2: i32) -> (i32, i32) {
    %c0_i32 = arith.constant 0 : i32
    %c0_i32_0 = arith.constant 0 : i32
    return %c0_i32, %arg1 : i32, i32
  }
  func.func @transform_8(%arg0: i32, %arg1: i32, %arg2: i32) -> (i32, i32) {
    %c0_i32 = arith.constant 0 : i32
    %c0_i32_0 = arith.constant 0 : i32
    return %c0_i32, %arg1 : i32, i32
  }
  func.func @transform_9(%arg0: i32, %arg1: i32, %arg2: i32) -> (i32, i32) {
    %c0_i32 = arith.constant 0 : i32
    return %arg0, %arg1 : i32, i32
  }
  func.func @transform_10(%arg0: i32, %arg1: i32, %arg2: i32) -> (i32, i32) {
    %c0_i32 = arith.constant 0 : i32
    return %arg0, %arg1 : i32, i32
  }
  func.func @transform_11(%arg0: i32, %arg1: i32, %arg2: i32) -> (i32, i32) {
    %c0_i32 = arith.constant 0 : i32
    return %arg0, %arg1 : i32, i32
  }
}

</mosaic_0001>

<llo_original>
// kernel: tpu_custom_call.1
$region0: #{tpu_custom_call.1}
  #allocation0 [shape = 'u32[]', space=smem, size = 0x4, offset = 0x4, fixed_abs, tag = 'smem constant byte address 0x4 - core index']
  #allocation1 [shape = 'u32[144,128]{1,0:T(1,128)}', space=vmem, size = 0x12000, scoped, tag = 'internal scratch']
  #allocation2 [shape = 'f32[16,32]{1,0:T(8,128)}', space=vmem, size = 0x2000, scoped, tag = 'scratch operand']
  #allocation3 [shape = 'f32[16,32]{1,0:T(8,128)}', space=vmem, size = 0x2000, scoped, tag = 'scratch operand']
  #allocation4 [shape = 'f32[16,32]{1,0:T(8,128)}', space=vmem, size = 0x2000, scoped, tag = 'scratch operand']
  %s0 = inlined_call_operand.hbm [shape: f32[16,32], index: 0, kind: input, shape index: {}]
  %s1 = inlined_call_operand.hbm [shape: f32[16,32], index: 1, kind: input, shape index: {}]
  %s2 = inlined_call_operand.hbm [shape: f32[16,32], index: 2, kind: input, shape index: {}]
  %s3 = inlined_call_operand.hbm [shape: f32[32,32], index: 3, kind: input, shape index: {}]
  %s4 = inlined_call_operand.hbm [shape: f32[32,32], index: 4, kind: input, shape index: {}]
  %s5 = inlined_call_operand.hbm [shape: f32[32,32], index: 5, kind: input, shape index: {}]
  %s6 = inlined_call_operand.hbm [shape: f32[1,32], index: 6, kind: input, shape index: {}]
  %s7 = inlined_call_operand.hbm [shape: f32[1,32], index: 7, kind: input, shape index: {}]
  %s8 = inlined_call_operand.hbm [shape: f32[1,32], index: 8, kind: input, shape index: {}]
  %s9 = inlined_call_operand.hbm [shape: f32[16,32], index: 9, kind: output, shape index: {0}]
  %s10 = inlined_call_operand.hbm [shape: f32[16,32], index: 10, kind: output, shape index: {1}]
  %s11 = inlined_call_operand.hbm [shape: f32[16,32], index: 11, kind: output, shape index: {2}]
  %12 = xla_tuple %s9, %s10, %s11
  %s13 = sld [smem:[#allocation0]]
  $region106: #{tpu_custom_call.1} parent=0
    _
  %s15 = ssub.s32 1, %s13
  %s16 = scalar_select 0, %s15, %s13
  $region1: #{tpu_custom_call.1} parent=0
    #allocation5 [shape = 'u8[8192]{0}', space=vmem, size = 0x2000, scoped, tag = 'input window, operand 0, single buffered']
    #allocation6 [shape = 's32[1]{0}', space=sflag, size = 0x4, scoped, tag = 'scoped memory for tpu_custom_call.1']
    #allocation7 [shape = 's32[1]{0}', space=sflag, size = 0x4, scoped, tag = 'scoped memory for tpu_custom_call.1']
    #allocation8 [shape = 'u8[8192]{0}', space=vmem, size = 0x2000, scoped, tag = 'input window, operand 1, single buffered']
    #allocation9 [shape = 's32[1]{0}', space=sflag, size = 0x4, scoped, tag = 'scoped memory for tpu_custom_call.1']
    #allocation10 [shape = 'u8[8192]{0}', space=vmem, size = 0x2000, scoped, tag = 'input window, operand 2, single buffered']
    #allocation11 [shape = 'u8[16384]{0}', space=vmem, size = 0x4000, scoped, tag = 'input window, operand 3, single buffered']
    #allocation12 [shape = 's32[1]{0}', space=sflag, size = 0x4, scoped, tag = 'scoped memory for tpu_custom_call.1']
    #allocation13 [shape = 'u8[16384]{0}', space=vmem, size = 0x4000, scoped, tag = 'input window, operand 4, single buffered']
    #allocation14 [shape = 'u8[16384]{0}', space=vmem, size = 0x4000, scoped, tag = 'input window, operand 5, single buffered']
    #allocation15 [shape = 's32[1]{0}', space=sflag, size = 0x4, scoped, tag = 'scoped memory for tpu_custom_call.1']
    #allocation16 [shape = 'u8[512]{0}', space=vmem, size = 0x400, scoped, tag = 'input window, operand 6, single buffered']
    #allocation17 [shape = 'u8[512]{0}', space=vmem, size = 0x400, scoped, tag = 'input window, operand 7, single buffered']
    #allocation18 [shape = 's32[1]{0}', space=sflag, size = 0x4, scoped, tag = 'scoped memory for tpu_custom_call.1']
    #allocation19 [shape = 'u8[512]{0}', space=vmem, size = 0x400, scoped, tag = 'input window, operand 8, single buffered']
    #allocation20 [shape = 'u8[8192]{0}', space=vmem, size = 0x2000, scoped, tag = 'output window, operand 0, single buffered']
    #allocation21 [shape = 'u8[8192]{0}', space=vmem, size = 0x2000, scoped, tag = 'output window, operand 1, single buffered']
    #allocation22 [shape = 's32[1]{0}', space=sflag, size = 0x4, scoped, tag = 'scoped memory for tpu_custom_call.1']
    #allocation23 [shape = 'u8[8192]{0}', space=vmem, size = 0x2000, scoped, tag = 'output window, operand 2, single buffered']
    %17 = vsyncpa [#allocation6], 0
    %18 = vsyncpa [#allocation9], 0
    %19 = vsyncpa [#allocation12], 0
    %20 = vsyncpa [#allocation15], 0
    %21 = vsyncpa [#allocation18], 0
    %22 = vsyncpa [#allocation7], 0
    %23 = vsyncpa [#allocation22], 0
    // Predicated region
    $region2: #{tpu_custom_call.1} parent=1 // pred_check
      _
    $region3: #{tpu_custom_call.1} parent=1 // pred_check_branch
      %25 = sbr.rel (0) target = $region5
    $region4: #{tpu_custom_call.1} parent=1 // pred_region
      %s27 = ssub.s32 256, 256
      %28 = vsyncadd [#allocation6], %s27
      %s29 = sshll.u32 [#allocation5], 4
      %s30 = int_to_ptr.vmem [resolvable:$true] %s29
      %35 = dma.hbm_to_vmem [thread:$0]  %s0, 256, %s30, [#allocation6], 128, 128, 8
    $region5: #{tpu_custom_call.1} parent=1 // pred_fallthru
      _
    // Predicated region
    $region6: #{tpu_custom_call.1} parent=1 // pred_check
      _
    $region7: #{tpu_custom_call.1} parent=1 // pred_check_branch
      %37 = sbr.rel (0) target = $region9
    $region8: #{tpu_custom_call.1} parent=1 // pred_region
      %s39 = ssub.s32 256, 256
      %40 = vsyncadd [#allocation9], %s39
      %s41 = sshll.u32 [#allocation8], 4
      %s42 = int_to_ptr.vmem [resolvable:$true] %s41
      %47 = dma.hbm_to_vmem [thread:$0]  %s1, 256, %s42, [#allocation9], 128, 128, 8
    $region9: #{tpu_custom_call.1} parent=1 // pred_fallthru
      _
    // Predicated region
    $region10: #{tpu_custom_call.1} parent=1 // pred_check
      _
    $region11: #{tpu_custom_call.1} parent=1 // pred_check_branch
      %49 = sbr.rel (0) target = $region13
    $region12: #{tpu_custom_call.1} parent=1 // pred_region
      %s51 = ssub.s32 256, 256
      %52 = vsyncadd [#allocation9], %s51
      %s53 = sshll.u32 [#allocation10], 4
      %s54 = int_to_ptr.vmem [resolvable:$true] %s53
      %59 = dma.hbm_to_vmem [thread:$0]  %s2, 256, %s54, [#allocation9], 128, 128, 8
    $region13: #{tpu_custom_call.1} parent=1 // pred_fallthru
      _
    // Predicated region
    $region14: #{tpu_custom_call.1} parent=1 // pred_check
      _
    $region15: #{tpu_custom_call.1} parent=1 // pred_check_branch
      %61 = sbr.rel (0) target = $region17
    $region16: #{tpu_custom_call.1} parent=1 // pred_region
      %s63 = ssub.s32 512, 512
      %64 = vsyncadd [#allocation12], %s63
      %s65 = sshll.u32 [#allocation11], 4
      %s66 = int_to_ptr.vmem [resolvable:$true] %s65
      %71 = dma.hbm_to_vmem [thread:$0]  %s3, 512, %s66, [#allocation12], 128, 128, 8
    $region17: #{tpu_custom_call.1} parent=1 // pred_fallthru
      _
    // Predicated region
    $region18: #{tpu_custom_call.1} parent=1 // pred_check
      _
    $region19: #{tpu_custom_call.1} parent=1 // pred_check_branch
      %73 = sbr.rel (0) target = $region21
    $region20: #{tpu_custom_call.1} parent=1 // pred_region
      %s75 = ssub.s32 512, 512
      %76 = vsyncadd [#allocation12], %s75
      %s77 = sshll.u32 [#allocation13], 4
      %s78 = int_to_ptr.vmem [resolvable:$true] %s77
      %83 = dma.hbm_to_vmem [thread:$0]  %s4, 512, %s78, [#allocation12], 128, 128, 8
    $region21: #{tpu_custom_call.1} parent=1 // pred_fallthru
      _
    // Predicated region
    $region22: #{tpu_custom_call.1} parent=1 // pred_check
      _
    $region23: #{tpu_custom_call.1} parent=1 // pred_check_branch
      %85 = sbr.rel (0) target = $region25
    $region24: #{tpu_custom_call.1} parent=1 // pred_region
      %s87 = ssub.s32 512, 512
      %88 = vsyncadd [#allocation15], %s87
      %s89 = sshll.u32 [#allocation14], 4
      %s90 = int_to_ptr.vmem [resolvable:$true] %s89
      %95 = dma.hbm_to_vmem [thread:$0]  %s5, 512, %s90, [#allocation15], 128, 128, 8
    $region25: #{tpu_custom_call.1} parent=1 // pred_fallthru
      _
    // Predicated region
    $region26: #{tpu_custom_call.1} parent=1 // pred_check
      _
    $region27: #{tpu_custom_call.1} parent=1 // pred_check_branch
      %97 = sbr.rel (0) target = $region29
    $region28: #{tpu_custom_call.1} parent=1 // pred_region
      %s99 = ssub.s32 16, 16
      %100 = vsyncadd [#allocation15], %s99
      %s102 = sshll.u32 [#allocation16], 4
      %s103 = int_to_ptr.vmem [resolvable:$true] %s102
      %105 = dma.hbm_to_vmem [thread:$0]  %s6, 16, %s103, [#allocation15]
    $region29: #{tpu_custom_call.1} parent=1 // pred_fallthru
      _
    // Predicated region
    $region30: #{tpu_custom_call.1} parent=1 // pred_check
      _
    $region31: #{tpu_custom_call.1} parent=1 // pred_check_branch
      %107 = sbr.rel (0) target = $region33
    $region32: #{tpu_custom_call.1} parent=1 // pred_region
      %s109 = ssub.s32 16, 16
      %110 = vsyncadd [#allocation18], %s109
      %s112 = sshll.u32 [#allocation17], 4
      %s113 = int_to_ptr.vmem [resolvable:$true] %s112
      %115 = dma.hbm_to_vmem [thread:$0]  %s7, 16, %s113, [#allocation18]
    $region33: #{tpu_custom_call.1} parent=1 // pred_fallthru
      _
    // Predicated region
    $region34: #{tpu_custom_call.1} parent=1 // pred_check
      _
    $region35: #{tpu_custom_call.1} parent=1 // pred_check_branch
      %117 = sbr.rel (0) target = $region37
    $region36: #{tpu_custom_call.1} parent=1 // pred_region
      %s119 = ssub.s32 16, 16
      %120 = vsyncadd [#allocation18], %s119
      %s122 = sshll.u32 [#allocation19], 4
      %s123 = int_to_ptr.vmem [resolvable:$true] %s122
      %125 = dma.hbm_to_vmem [thread:$0]  %s8, 16, %s123, [#allocation18]
    $region37: #{tpu_custom_call.1} parent=1 // pred_fallthru
      _
    // Predicated region
    $region38: #{tpu_custom_call.1} parent=1 // pred_check
      _
    $region39: #{tpu_custom_call.1} parent=1 // pred_check_branch
      %127 = sbr.rel (0) target = $region41
    $region40: #{tpu_custom_call.1} parent=1 // pred_region
      %128 = dma.done [#allocation6], 256
    $region41: #{tpu_custom_call.1} parent=1 // pred_fallthru
      _
    // Predicated region
    $region42: #{tpu_custom_call.1} parent=1 // pred_check
      _
    $region43: #{tpu_custom_call.1} parent=1 // pred_check_branch
      %130 = sbr.rel (0) target = $region45
    $region44: #{tpu_custom_call.1} parent=1 // pred_region
      %131 = dma.done [#allocation9], 256
    $region45: #{tpu_custom_call.1} parent=1 // pred_fallthru
      _
    // Predicated region
    $region46: #{tpu_custom_call.1} parent=1 // pred_check
      _
    $region47: #{tpu_custom_call.1} parent=1 // pred_check_branch
      %133 = sbr.rel (0) target = $region49
    $region48: #{tpu_custom_call.1} parent=1 // pred_region
      %134 = dma.done [#allocation9], 256
    $region49: #{tpu_custom_call.1} parent=1 // pred_fallthru
      _
    // Predicated region
    $region50: #{tpu_custom_call.1} parent=1 // pred_check
      _
    $region51: #{tpu_custom_call.1} parent=1 // pred_check_branch
      %136 = sbr.rel (0) target = $region53
    $region52: #{tpu_custom_call.1} parent=1 // pred_region
      %137 = dma.done [#allocation12], 512
    $region53: #{tpu_custom_call.1} parent=1 // pred_fallthru
      _
    // Predicated region
    $region54: #{tpu_custom_call.1} parent=1 // pred_check
      _
    $region55: #{tpu_custom_call.1} parent=1 // pred_check_branch
      %139 = sbr.rel (0) target = $region57
    $region56: #{tpu_custom_call.1} parent=1 // pred_region
      %140 = dma.done [#allocation12], 512
    $region57: #{tpu_custom_call.1} parent=1 // pred_fallthru
      _
    // Predicated region
    $region58: #{tpu_custom_call.1} parent=1 // pred_check
      _
    $region59: #{tpu_custom_call.1} parent=1 // pred_check_branch
      %142 = sbr.rel (0) target = $region61
    $region60: #{tpu_custom_call.1} parent=1 // pred_region
      %143 = dma.done [#allocation15], 512
    $region61: #{tpu_custom_call.1} parent=1 // pred_fallthru
      _
    // Predicated region
    $region62: #{tpu_custom_call.1} parent=1 // pred_check
      _
    $region63: #{tpu_custom_call.1} parent=1 // pred_check_branch
      %145 = sbr.rel (0) target = $region65
    $region64: #{tpu_custom_call.1} parent=1 // pred_region
      %146 = dma.done [#allocation15], 16
    $region65: #{tpu_custom_call.1} parent=1 // pred_fallthru
      _
    // Predicated region
    $region66: #{tpu_custom_call.1} parent=1 // pred_check
      _
    $region67: #{tpu_custom_call.1} parent=1 // pred_check_branch
      %148 = sbr.rel (0) target = $region69
    $region68: #{tpu_custom_call.1} parent=1 // pred_region
      %149 = dma.done [#allocation18], 16
    $region69: #{tpu_custom_call.1} parent=1 // pred_fallthru
      _
    // Predicated region
    $region70: #{tpu_custom_call.1} parent=1 // pred_check
      _
    $region71: #{tpu_custom_call.1} parent=1 // pred_check_branch
      %151 = sbr.rel (0) target = $region73
    $region72: #{tpu_custom_call.1} parent=1 // pred_region
      %152 = dma.done [#allocation18], 16
    $region73: #{tpu_custom_call.1} parent=1 // pred_fallthru
      _
    %p153 = scmp.eq.s32.totalorder 0, 0
    // Predicated region
    $region74: #{tpu_custom_call.1} parent=1 // pred_check
      %p154 = pneg %p153
    $region75: #{tpu_custom_call.1} parent=1 // pred_check_branch
      %156 = sbr.rel (%p154) target = $region77
    $region76: #{tpu_custom_call.1} parent=1 // pred_region
      %vm157 = vcmask 261120
      %158 = vst.msk [vmem:[#allocation2] sm:$0xff] %vm157, 0.0
      %159 = vst.msk [vmem:[#allocation2 + $0x8] sm:$0xff] %vm157, 0.0
      %160 = vst.msk [vmem:[#allocation3] sm:$0xff] %vm157, 0.0
      %161 = vst.msk [vmem:[#allocation3 + $0x8] sm:$0xff] %vm157, 0.0
      %162 = vst.msk [vmem:[#allocation4] sm:$0xff] %vm157, 0.0
      %163 = vst.msk [vmem:[#allocation4 + $0x8] sm:$0xff] %vm157, 0.0
    $region77: #{tpu_custom_call.1} parent=1 // pred_fallthru
      _
    %v164 = vld [vmem:[#allocation2] sm:$0xff]
    %v165 = vld [vmem:[#allocation2 + $0x8] sm:$0xff]
    %v166 = vld [vmem:[#allocation5] sm:$0xff]
    %v167 = vld [vmem:[#allocation5 + $0x8] sm:$0xff]
    %v168 = vld [vmem:[#allocation11] sm:$0xff]
    %v169 = vld [vmem:[#allocation11 + $0x8] sm:$0xff]
    %v170 = vld [vmem:[#allocation11 + $0x10] sm:$0xff]
    %v171 = vld [vmem:[#allocation11 + $0x18] sm:$0xff]
    %vm172 = vcmask 261120
    %v174 = vsel %vm172, %v166, 0
    %v177 = vsel %vm172, %v167, 0
    %179 = vmatprep.subr.mxu0 0.0
    %180 = vmatpush1.msra.mxu0 %v168
    %181 = vmatprep.subr.mxu0 0.0
    %182 = vmatpush1.msra.mxu0 %v169
    %183 = vmatprep.subr.mxu0 0.0
    %184 = vmatpush1.msra.mxu0 %v170
    %185 = vmatprep.subr.mxu0 0.0
    %186 = vmatpush1.msra.mxu0 %v171
    %187 = vmatprep.subr.mxu0 0.0
    %188 = vmatpush1.msra.mxu0 0.0
    %189 = vmatprep.subr.mxu0 0.0
    %190 = vmatpush1.msra.mxu0 0.0
    %191 = vmatprep.subr.mxu0 0.0
    %192 = vmatpush1.msra.mxu0 0.0
    %193 = vmatprep.subr.mxu0 0.0
    %194 = vmatpush1.msra.mxu0 0.0
    %195 = vmatprep.subr.mxu0 0.0
    %196 = vmatpush1.msra.mxu0 0.0
    %197 = vmatprep.subr.mxu0 0.0
    %198 = vmatpush1.msra.mxu0 0.0
    %199 = vmatprep.subr.mxu0 0.0
    %200 = vmatpush1.msra.mxu0 0.0
    %201 = vmatprep.subr.mxu0 0.0
    %202 = vmatpush1.msra.mxu0 0.0
    %203 = vmatprep.subr.mxu0 0.0
    %204 = vmatpush1.msra.mxu0 0.0
    %205 = vmatprep.subr.mxu0 0.0
    %206 = vmatpush1.msra.mxu0 0.0
    %207 = vmatprep.subr.mxu0 0.0
    %208 = vmatpush1.msra.mxu0 0.0
    %209 = vmatprep.subr.mxu0 0.0
    %210 = vmatpush1.msra.mxu0 0.0
    %211 = vmatprep.subr.mxu0 0.0
    %212 = vmatpush1.msra.mxu0 0.0
    %213 = vmatprep.subr.mxu0 0.0
    %214 = vmatpush1.msra.mxu0 0.0
    %215 = vmatprep.subr.mxu0 0.0
    %216 = vmatpush1.msra.mxu0 0.0
    %217 = vmatprep.subr.mxu0 0.0
    %218 = vmatpush1.msra.mxu0 0.0
    %219 = vmatprep.subr.mxu0 0.0
    %220 = vmatpush1.msra.mxu0 0.0
    %221 = vmatprep.subr.mxu0 0.0
    %222 = vmatpush1.msra.mxu0 0.0
    %223 = vmatprep.subr.mxu0 0.0
    %224 = vmatpush1.msra.mxu0 0.0
    %225 = vmatprep.subr.mxu0 0.0
    %226 = vmatpush1.msra.mxu0 0.0
    %227 = vmatprep.subr.mxu0 0.0
    %228 = vmatpush1.msra.mxu0 0.0
    %229 = vmatprep.subr.mxu0 0.0
    %230 = vmatpush1.msra.mxu0 0.0
    %231 = vmatprep.subr.mxu0 0.0
    %232 = vmatpush1.msra.mxu0 0.0
    %233 = vmatprep.subr.mxu0 0.0
    %234 = vmatpush1.msra.mxu0 0.0
    %235 = vmatprep.subr.mxu0 0.0
    %236 = vmatpush1.msra.mxu0 0.0
    %237 = vmatprep.subr.mxu0 0.0
    %238 = vmatpush1.msra.mxu0 0.0
    %239 = vmatprep.subr.mxu0 0.0
    %240 = vmatpush1.msra.mxu0 0.0
    %241 = vmatprep.subr.mxu0 0.0
    %242 = vmatpush1.msra.mxu0 0.0
    %243 = vmatprep.mubr.f32.mxu0 0.0
    %244 = vmatmul.mubr.f32.gmra.mrb[0].mxu0 %v174
    %v245 = vpop.f32.mrb[0].mxu0
    %v246 = vadd.f32 0.0, %v245
    %v247 = vpop.f32.mrb[0].mxu0
    %248 = vmatprep.mubr.f32.mxu0 0.0
    %249 = vmatmul.mubr.f32.gmra.mrb[0].mxu0 %v177
    %v250 = vpop.f32.mrb[0].mxu0
    %v251 = vadd.f32 0.0, %v250
    %v252 = vpop.f32.mrb[0].mxu0
    %253 = vdwg.mxu0
    %v254 = vadd.f32 %v164, %v246
    %v255 = vadd.f32 %v165, %v251
    %256 = vst.msk [vmem:[#allocation2] sm:$0xff] %vm172, %v254
    %257 = vst.msk [vmem:[#allocation2 + $0x8] sm:$0xff] %vm172, %v255
    %v258 = vld [vmem:[#allocation3] sm:$0xff]
    %v259 = vld [vmem:[#allocation3 + $0x8] sm:$0xff]
    %v260 = vld [vmem:[#allocation8] sm:$0xff]
    %v261 = vld [vmem:[#allocation8 + $0x8] sm:$0xff]
    %v262 = vld [vmem:[#allocation13] sm:$0xff]
    %v263 = vld [vmem:[#allocation13 + $0x8] sm:$0xff]
    %v264 = vld [vmem:[#allocation13 + $0x10] sm:$0xff]
    %v265 = vld [vmem:[#allocation13 + $0x18] sm:$0xff]
    %v267 = vsel %vm172, %v260, 0
    %v270 = vsel %vm172, %v261, 0
    %272 = vmatprep.subr.mxu0 0.0
    %273 = vmatpush1.msra.mxu0 %v262
    %274 = vmatprep.subr.mxu0 0.0
    %275 = vmatpush1.msra.mxu0 %v263
    %276 = vmatprep.subr.mxu0 0.0
    %277 = vmatpush1.msra.mxu0 %v264
    %278 = vmatprep.subr.mxu0 0.0
    %279 = vmatpush1.msra.mxu0 %v265
    %280 = vmatprep.subr.mxu0 0.0
    %281 = vmatpush1.msra.mxu0 0.0
    %282 = vmatprep.subr.mxu0 0.0
    %283 = vmatpush1.msra.mxu0 0.0
    %284 = vmatprep.subr.mxu0 0.0
    %285 = vmatpush1.msra.mxu0 0.0
    %286 = vmatprep.subr.mxu0 0.0
    %287 = vmatpush1.msra.mxu0 0.0
    %288 = vmatprep.subr.mxu0 0.0
    %289 = vmatpush1.msra.mxu0 0.0
    %290 = vmatprep.subr.mxu0 0.0
    %291 = vmatpush1.msra.mxu0 0.0
    %292 = vmatprep.subr.mxu0 0.0
    %293 = vmatpush1.msra.mxu0 0.0
    %294 = vmatprep.subr.mxu0 0.0
    %295 = vmatpush1.msra.mxu0 0.0
    %296 = vmatprep.subr.mxu0 0.0
    %297 = vmatpush1.msra.mxu0 0.0
    %298 = vmatprep.subr.mxu0 0.0
    %299 = vmatpush1.msra.mxu0 0.0
    %300 = vmatprep.subr.mxu0 0.0
    %301 = vmatpush1.msra.mxu0 0.0
    %302 = vmatprep.subr.mxu0 0.0
    %303 = vmatpush1.msra.mxu0 0.0
    %304 = vmatprep.subr.mxu0 0.0
    %305 = vmatpush1.msra.mxu0 0.0
    %306 = vmatprep.subr.mxu0 0.0
    %307 = vmatpush1.msra.mxu0 0.0
    %308 = vmatprep.subr.mxu0 0.0
    %309 = vmatpush1.msra.mxu0 0.0
    %310 = vmatprep.subr.mxu0 0.0
    %311 = vmatpush1.msra.mxu0 0.0
    %312 = vmatprep.subr.mxu0 0.0
    %313 = vmatpush1.msra.mxu0 0.0
    %314 = vmatprep.subr.mxu0 0.0
    %315 = vmatpush1.msra.mxu0 0.0
    %316 = vmatprep.subr.mxu0 0.0
    %317 = vmatpush1.msra.mxu0 0.0
    %318 = vmatprep.subr.mxu0 0.0
    %319 = vmatpush1.msra.mxu0 0.0
    %320 = vmatprep.subr.mxu0 0.0
    %321 = vmatpush1.msra.mxu0 0.0
    %322 = vmatprep.subr.mxu0 0.0
    %323 = vmatpush1.msra.mxu0 0.0
    %324 = vmatprep.subr.mxu0 0.0
    %325 = vmatpush1.msra.mxu0 0.0
    %326 = vmatprep.subr.mxu0 0.0
    %327 = vmatpush1.msra.mxu0 0.0
    %328 = vmatprep.subr.mxu0 0.0
    %329 = vmatpush1.msra.mxu0 0.0
    %330 = vmatprep.subr.mxu0 0.0
    %331 = vmatpush1.msra.mxu0 0.0
    %332 = vmatprep.subr.mxu0 0.0
    %333 = vmatpush1.msra.mxu0 0.0
    %334 = vmatprep.subr.mxu0 0.0
    %335 = vmatpush1.msra.mxu0 0.0
    %336 = vmatprep.mubr.f32.mxu0 0.0
    %337 = vmatmul.mubr.f32.gmra.mrb[0].mxu0 %v267
    %v338 = vpop.f32.mrb[0].mxu0
    %v339 = vadd.f32 0.0, %v338
    %v340 = vpop.f32.mrb[0].mxu0
    %341 = vmatprep.mubr.f32.mxu0 0.0
    %342 = vmatmul.mubr.f32.gmra.mrb[0].mxu0 %v270
    %v343 = vpop.f32.mrb[0].mxu0
    %v344 = vadd.f32 0.0, %v343
    %v345 = vpop.f32.mrb[0].mxu0
    %346 = vdwg.mxu0
    %v347 = vadd.f32 %v258, %v339
    %v348 = vadd.f32 %v259, %v344
    %349 = vst.msk [vmem:[#allocation3] sm:$0xff] %vm172, %v347
    %350 = vst.msk [vmem:[#allocation3 + $0x8] sm:$0xff] %vm172, %v348
    %v351 = vld [vmem:[#allocation4] sm:$0xff]
    %v352 = vld [vmem:[#allocation4 + $0x8] sm:$0xff]
    %v353 = vld [vmem:[#allocation10] sm:$0xff]
    %v354 = vld [vmem:[#allocation10 + $0x8] sm:$0xff]
    %v355 = vld [vmem:[#allocation14] sm:$0xff]
    %v356 = vld [vmem:[#allocation14 + $0x8] sm:$0xff]
    %v357 = vld [vmem:[#allocation14 + $0x10] sm:$0xff]
    %v358 = vld [vmem:[#allocation14 + $0x18] sm:$0xff]
    %v360 = vsel %vm172, %v353, 0
    %v363 = vsel %vm172, %v354, 0
    %365 = vmatprep.subr.mxu0 0.0
    %366 = vmatpush1.msra.mxu0 %v355
    %367 = vmatprep.subr.mxu0 0.0
    %368 = vmatpush1.msra.mxu0 %v356
    %369 = vmatprep.subr.mxu0 0.0
    %370 = vmatpush1.msra.mxu0 %v357
    %371 = vmatprep.subr.mxu0 0.0
    %372 = vmatpush1.msra.mxu0 %v358
    %373 = vmatprep.subr.mxu0 0.0
    %374 = vmatpush1.msra.mxu0 0.0
    %375 = vmatprep.subr.mxu0 0.0
    %376 = vmatpush1.msra.mxu0 0.0
    %377 = vmatprep.subr.mxu0 0.0
    %378 = vmatpush1.msra.mxu0 0.0
    %379 = vmatprep.subr.mxu0 0.0
    %380 = vmatpush1.msra.mxu0 0.0
    %381 = vmatprep.subr.mxu0 0.0
    %382 = vmatpush1.msra.mxu0 0.0
    %383 = vmatprep.subr.mxu0 0.0
    %384 = vmatpush1.msra.mxu0 0.0
    %385 = vmatprep.subr.mxu0 0.0
    %386 = vmatpush1.msra.mxu0 0.0
    %387 = vmatprep.subr.mxu0 0.0
    %388 = vmatpush1.msra.mxu0 0.0
    %389 = vmatprep.subr.mxu0 0.0
    %390 = vmatpush1.msra.mxu0 0.0
    %391 = vmatprep.subr.mxu0 0.0
    %392 = vmatpush1.msra.mxu0 0.0
    %393 = vmatprep.subr.mxu0 0.0
    %394 = vmatpush1.msra.mxu0 0.0
    %395 = vmatprep.subr.mxu0 0.0
    %396 = vmatpush1.msra.mxu0 0.0
    %397 = vmatprep.subr.mxu0 0.0
    %398 = vmatpush1.msra.mxu0 0.0
    %399 = vmatprep.subr.mxu0 0.0
    %400 = vmatpush1.msra.mxu0 0.0
    %401 = vmatprep.subr.mxu0 0.0
    %402 = vmatpush1.msra.mxu0 0.0
    %403 = vmatprep.subr.mxu0 0.0
    %404 = vmatpush1.msra.mxu0 0.0
    %405 = vmatprep.subr.mxu0 0.0
    %406 = vmatpush1.msra.mxu0 0.0
    %407 = vmatprep.subr.mxu0 0.0
    %408 = vmatpush1.msra.mxu0 0.0
    %409 = vmatprep.subr.mxu0 0.0
    %410 = vmatpush1.msra.mxu0 0.0
    %411 = vmatprep.subr.mxu0 0.0
    %412 = vmatpush1.msra.mxu0 0.0
    %413 = vmatprep.subr.mxu0 0.0
    %414 = vmatpush1.msra.mxu0 0.0
    %415 = vmatprep.subr.mxu0 0.0
    %416 = vmatpush1.msra.mxu0 0.0
    %417 = vmatprep.subr.mxu0 0.0
    %418 = vmatpush1.msra.mxu0 0.0
    %419 = vmatprep.subr.mxu0 0.0
    %420 = vmatpush1.msra.mxu0 0.0
    %421 = vmatprep.subr.mxu0 0.0
    %422 = vmatpush1.msra.mxu0 0.0
    %423 = vmatprep.subr.mxu0 0.0
    %424 = vmatpush1.msra.mxu0 0.0
    %425 = vmatprep.subr.mxu0 0.0
    %426 = vmatpush1.msra.mxu0 0.0
    %427 = vmatprep.subr.mxu0 0.0
    %428 = vmatpush1.msra.mxu0 0.0
    %429 = vmatprep.mubr.f32.mxu0 0.0
    %430 = vmatmul.mubr.f32.gmra.mrb[0].mxu0 %v360
    %v431 = vpop.f32.mrb[0].mxu0
    %v432 = vadd.f32 0.0, %v431
    %v433 = vpop.f32.mrb[0].mxu0
    %434 = vmatprep.mubr.f32.mxu0 0.0
    %435 = vmatmul.mubr.f32.gmra.mrb[0].mxu0 %v363
    %v436 = vpop.f32.mrb[0].mxu0
    %v437 = vadd.f32 0.0, %v436
    %v438 = vpop.f32.mrb[0].mxu0
    %439 = vdwg.mxu0
    %v440 = vadd.f32 %v351, %v432
    %v441 = vadd.f32 %v352, %v437
    %442 = vst.msk [vmem:[#allocation4] sm:$0xff] %vm172, %v440
    %443 = vst.msk [vmem:[#allocation4 + $0x8] sm:$0xff] %vm172, %v441
    // Predicated region
    $region78: #{tpu_custom_call.1} parent=1 // pred_check
      %p444 = pneg %p153
    $region79: #{tpu_custom_call.1} parent=1 // pred_check_branch
      %446 = sbr.rel (%p444) target = $region81
    $region80: #{tpu_custom_call.1} parent=1 // pred_region
      %v447 = vld [vmem:[#allocation2] sm:$0xff]
      %v448 = vld [vmem:[#allocation2 + $0x8] sm:$0xff]
      %v449 = vld [vmem:[#allocation16] sm:$0x1]
      %v451 = vlaneseq
      %v452 = vshrl.u32 %v451, 7
      %v453 = vsub.s32 0, %v452
      %v454 = vrot.slane %v449, %v453
      %v456 = vadd.f32 %v447, %v454
      %v457 = vadd.f32 %v448, %v454
      %458 = vst.msk [vmem:[#allocation20] sm:$0xff] %vm172, %v456
      %459 = vst.msk [vmem:[#allocation20 + $0x8] sm:$0xff] %vm172, %v457
      %v460 = vld [vmem:[#allocation3] sm:$0xff]
      %v461 = vld [vmem:[#allocation3 + $0x8] sm:$0xff]
      %v462 = vld [vmem:[#allocation17] sm:$0x1]
      %v464 = vlaneseq
      %v465 = vshrl.u32 %v464, 7
      %v466 = vsub.s32 0, %v465
      %v467 = vrot.slane %v462, %v466
      %v469 = vadd.f32 %v460, %v467
      %v470 = vadd.f32 %v461, %v467
      %471 = vst.msk [vmem:[#allocation21] sm:$0xff] %vm172, %v469
      %472 = vst.msk [vmem:[#allocation21 + $0x8] sm:$0xff] %vm172, %v470
      %v473 = vld [vmem:[#allocation4] sm:$0xff]
      %v474 = vld [vmem:[#allocation4 + $0x8] sm:$0xff]
      %v475 = vld [vmem:[#allocation19] sm:$0x1]
      %v477 = vlaneseq
      %v478 = vshrl.u32 %v477, 7
      %v479 = vsub.s32 0, %v478
      %v480 = vrot.slane %v475, %v479
      %v482 = vadd.f32 %v473, %v480
      %v483 = vadd.f32 %v474, %v480
      %484 = vst.msk [vmem:[#allocation23] sm:$0xff] %vm172, %v482
      %485 = vst.msk [vmem:[#allocation23 + $0x8] sm:$0xff] %vm172, %v483
    $region81: #{tpu_custom_call.1} parent=1 // pred_fallthru
      _
    // Predicated region
    $region82: #{tpu_custom_call.1} parent=1 // pred_check
      _
    $region83: #{tpu_custom_call.1} parent=1 // pred_check_branch
      %487 = sbr.rel (0) target = $region85
    $region84: #{tpu_custom_call.1} parent=1 // pred_region
      %s489 = ssub.s32 256, 256
      %490 = vsyncadd [#allocation7], %s489
      %s491 = sshll.u32 [#allocation20], 4
      %s492 = int_to_ptr.vmem [resolvable:$true] %s491
      %497 = dma.vmem_to_hbm [thread:$0]  %s492, 256, %s9, [#allocation7], 128, 128, 8
    $region85: #{tpu_custom_call.1} parent=1 // pred_fallthru
      _
    // Predicated region
    $region86: #{tpu_custom_call.1} parent=1 // pred_check
      _
    $region87: #{tpu_custom_call.1} parent=1 // pred_check_branch
      %499 = sbr.rel (0) target = $region89
    $region88: #{tpu_custom_call.1} parent=1 // pred_region
      %s501 = ssub.s32 256, 256
      %502 = vsyncadd [#allocation22], %s501
      %s503 = sshll.u32 [#allocation21], 4
      %s504 = int_to_ptr.vmem [resolvable:$true] %s503
      %509 = dma.vmem_to_hbm [thread:$0]  %s504, 256, %s10, [#allocation22], 128, 128, 8
    $region89: #{tpu_custom_call.1} parent=1 // pred_fallthru
      _
    // Predicated region
    $region90: #{tpu_custom_call.1} parent=1 // pred_check
      _
    $region91: #{tpu_custom_call.1} parent=1 // pred_check_branch
      %511 = sbr.rel (0) target = $region93
    $region92: #{tpu_custom_call.1} parent=1 // pred_region
      %s513 = ssub.s32 256, 256
      %514 = vsyncadd [#allocation22], %s513
      %s515 = sshll.u32 [#allocation23], 4
      %s516 = int_to_ptr.vmem [resolvable:$true] %s515
      %521 = dma.vmem_to_hbm [thread:$0]  %s516, 256, %s11, [#allocation22], 128, 128, 8
    $region93: #{tpu_custom_call.1} parent=1 // pred_fallthru
      _
    // Predicated region
    $region94: #{tpu_custom_call.1} parent=1 // pred_check
      _
    $region95: #{tpu_custom_call.1} parent=1 // pred_check_branch
      %523 = sbr.rel (0) target = $region97
    $region96: #{tpu_custom_call.1} parent=1 // pred_region
      %524 = dma.done [#allocation7], 256
    $region97: #{tpu_custom_call.1} parent=1 // pred_fallthru
      _
    // Predicated region
    $region98: #{tpu_custom_call.1} parent=1 // pred_check
      _
    $region99: #{tpu_custom_call.1} parent=1 // pred_check_branch
      %526 = sbr.rel (0) target = $region101
    $region100: #{tpu_custom_call.1} parent=1 // pred_region
      %527 = dma.done [#allocation22], 256
    $region101: #{tpu_custom_call.1} parent=1 // pred_fallthru
      _
    // Predicated region
    $region102: #{tpu_custom_call.1} parent=1 // pred_check
      _
    $region103: #{tpu_custom_call.1} parent=1 // pred_check_branch
      %529 = sbr.rel (0) target = $region105
    $region104: #{tpu_custom_call.1} parent=1 // pred_region
      %530 = dma.done [#allocation22], 256
    $region105: #{tpu_custom_call.1} parent=1 // pred_fallthru
      _
    %531 = vsyncpa [#allocation6], 1
    %532 = vsyncpa [#allocation9], 1
    %533 = vsyncpa [#allocation12], 1
    %534 = vsyncpa [#allocation15], 1
    %535 = vsyncpa [#allocation18], 1
    %536 = vsyncpa [#allocation7], 1
    %537 = vsyncpa [#allocation22], 1

</llo_original>
